<compile_context>
chip_gen: v6e
topology: v6e:2x2x1
jax: 0.10.0
libtpu: 0.0.40
codegen_flags: <defaults>
</compile_context>

<pallas_src>
import functools
import random

import jax
import jax.numpy as jnp
from jax.experimental import pallas as pl
from jax.experimental.pallas import tpu as pltpu


_LANE = 128
_MIN_SPLIT_BYTES = 2 * 1024 * 1024   # only multi-block problems >= 2 MiB
_MIN_BLOCKS = 4                      # >= 2x TensorCores (v7x has 2 TCs/chip)


def _noise_offset_kernel(noise_ref, offset_ref, out_ref, *, noise_offset):
    # offset stays f32; compute scale*offset in f32, cast once to noise dtype
    # (single rounding for bf16/fp8 noise), then add in the noise dtype.
    contrib = (jnp.float32(noise_offset) * offset_ref[...]).astype(noise_ref.dtype)
    out_ref[...] = noise_ref[...] + contrib


def _vmem_budgets():
    """Chip-aware (per-block byte budget, scoped-VMEM limit)."""
    target = 4 * 1024 * 1024
    limit = 32 * 1024 * 1024
    try:
        cap = pltpu.get_tpu_info().vmem_capacity_bytes
        if cap >= 100 * 1024 * 1024:
            # v5e / v6e: 128 MiB physical VMEM -> big blocks, roomy limit.
            target, limit = 8 * 1024 * 1024, 64 * 1024 * 1024
        else:
            # v7x: 64 MiB physical per TensorCore -> 6 MiB blocks, 48 MiB cap.
            target, limit = 6 * 1024 * 1024, 48 * 1024 * 1024
    except Exception:
        pass  # unknown chip / query unavailable: conservative defaults
    return target, limit


def _pick_tiles(rows, cols, itemsize, target_bytes):
    """(tile_rows, tile_cols): dtype-aware sublane quanta, lane multiples of 128,
    ~target_bytes per noise block, and >= _MIN_BLOCKS blocks for medium/large
    problems so both v7x TensorCores get work."""
    sublane = max(8, 32 // itemsize)

    # Lane axis: full extent when one sublane-group of rows fits the budget,
    # else a multiple of 128 (lane-dense, unmasked vst).
    if cols <= _LANE or sublane * cols * itemsize <= target_bytes:
        tile_cols = cols
    else:
        tile_cols = (target_bytes // (sublane * itemsize)) // _LANE * _LANE
        tile_cols = max(_LANE, min(tile_cols, (cols // _LANE) * _LANE))

    max_rows = max(
        sublane,
        (target_bytes // max(1, tile_cols * itemsize)) // sublane * sublane,
    )
    tile_rows = rows if rows <= max_rows else max_rows

    if rows * cols * itemsize >= _MIN_SPLIT_BYTES:
        def nblocks():
            return pl.cdiv(rows, tile_rows) * pl.cdiv(cols, tile_cols)

        # Split rows first (keeps full-width, contiguous row-tile DMAs).
        while nblocks() < _MIN_BLOCKS and tile_rows > sublane:
            new_rows = max(sublane, (tile_rows // 2) // sublane * sublane)
            if new_rows == tile_rows:
                break
            tile_rows = new_rows
        # Then split cols if still short (e.g. rows <= one sublane quantum).
        while nblocks() < _MIN_BLOCKS and tile_cols > _LANE:
            new_cols = max(_LANE, (tile_cols // 2) // _LANE * _LANE)
            if new_cols == tile_cols:
                break
            tile_cols = new_cols

    return tile_rows, tile_cols


def apply_noise_offset_pallas(noise, offset, noise_offset, *, donate_noise=False):
    """noise: (B, C, *spatial); offset: (B, C, 1, ...); returns noise + noise_offset*offset."""
    if noise.ndim < 2:
        raise ValueError("noise must have at least 2 dims (batch, channel, ...)")
    shape = noise.shape
    B, C = shape[0], shape[1]
    spatial = 1
    for d in shape[2:]:
        spatial *= d

    itemsize = jnp.dtype(noise.dtype).itemsize
    target_bytes, vmem_limit = _vmem_budgets()
    offset_f32 = offset.astype(jnp.float32)

    if spatial >= _LANE:
        # Primary layout: rows = B*C, cols = spatial. The offset is a tiny
        # resident (tile_rows, 1) f32 column; its block index is constant across
        # the inner col-grid axis, so it is not re-DMA'd between col tiles.
        rows, cols = B * C, spatial
        noise2d = noise.reshape(rows, cols)
        offset2d = offset_f32.reshape(rows, 1)
        tile_rows, tile_cols = _pick_tiles(rows, cols, itemsize, target_bytes)
        offset_spec = pl.BlockSpec((tile_rows, 1), lambda i, j: (i, 0))
    else:
        # Lane-density guard for tiny spatial extents: flatten channels into the
        # lane axis (rows = B, cols = C*spatial) and pre-broadcast the f32 offset
        # so the output last dim stays lane-dense. Costs one extra offset read,
        # only on small-spatial tensors (avoids ~4.5x masked-store penalty).
        rows, cols = B, C * spatial
        noise2d = noise.reshape(rows, cols)
        offset2d = jnp.broadcast_to(
            offset_f32.reshape(B, C, 1), (B, C, spatial)
        ).reshape(rows, cols)
        tile_rows, tile_cols = _pick_tiles(rows, cols, itemsize, target_bytes)
        offset_spec = pl.BlockSpec((tile_rows, tile_cols), lambda i, j: (i, j))

    grid = (pl.cdiv(rows, tile_rows), pl.cdiv(cols, tile_cols))
    kernel = functools.partial(_noise_offset_kernel, noise_offset=float(noise_offset))

    out2d = pl.pallas_call(
        kernel,
        out_shape=jax.ShapeDtypeStruct((rows, cols), noise.dtype),
        grid_spec=pltpu.PrefetchScalarGridSpec(
            num_scalar_prefetch=0,
            grid=grid,
            in_specs=[
                pl.BlockSpec((tile_rows, tile_cols), lambda i, j: (i, j)),
                offset_spec,
            ],
            out_specs=pl.BlockSpec((tile_rows, tile_cols), lambda i, j: (i, j)),
        ),
        compiler_params=pltpu.CompilerParams(
            dimension_semantics=("parallel", "parallel"),
            vmem_limit_bytes=vmem_limit,
        ),
        input_output_aliases=({0: 0} if donate_noise else {}),
    )(noise2d, offset2d)
    return out2d.reshape(shape)


class DiffusionLossPallas:
    """JAX/Pallas port of the concrete parts of neurosis DiffusionLoss."""

    def __init__(self, noise_offset: float = 0.0, noise_offset_chance: float = 0.0):
        self.noise_offset = min(max(noise_offset, 0.0), 1.0)
        self.noise_offset_chance = min(max(noise_offset_chance, 0.0), 1.0)

    def apply_noise_offset(self, noise, inputs, *, rng_key, donate_noise=False):
        if self.noise_offset <= 0:
            return noise
        # Host-level gate, exactly as the PyTorch reference (random.random()):
        # no device->host sync, no extra key split.
        if self.noise_offset_chance == 1.0 or random.random() < self.noise_offset_chance:
            off_shape = inputs.shape[:2] + (1,) * (inputs.ndim - 2)
            offset = jax.random.normal(rng_key, off_shape, dtype=jnp.float32)
            return apply_noise_offset_pallas(
                noise, offset, self.noise_offset, donate_noise=donate_noise
            )
        return noise

    # forward/_forward/get_loss are abstract in the reference module.
    # TODO(synk): abstract methods intentionally not implemented.


if __name__ == "__main__":
    key = jax.random.PRNGKey(0)
    k_noise, k_inputs, k_off, k_noise2, k_off2 = jax.random.split(key, 5)

    # Primary path: spatial (= H*W = 256) >= 128.
    B, C, H, W = 2, 4, 16, 16
    inputs = jax.random.normal(k_inputs, (B, C, H, W), dtype=jnp.float32)
    noise = jax.random.normal(k_noise, (B, C, H, W), dtype=jnp.float32)

    loss_mod = DiffusionLossPallas(noise_offset=0.1, noise_offset_chance=1.0)
    out = loss_mod.apply_noise_offset(noise, inputs, rng_key=k_off)
    out = jax.block_until_ready(out)

    offset_ref = jax.random.normal(k_off, (B, C, 1, 1), dtype=jnp.float32)
    expected = noise + 0.1 * offset_ref
    assert out.shape == noise.shape
    assert jnp.allclose(out, expected, atol=1e-6, rtol=1e-6), "mismatch vs reference"

    # Lane-density fallback path: spatial (= 4*4 = 16) < 128, C*spatial = 1024.
    B2, C2, H2, W2 = 2, 64, 4, 4
    noise_b = jax.random.normal(k_noise2, (B2, C2, H2, W2), dtype=jnp.float32)
    offset_b = jax.random.normal(k_off2, (B2, C2, 1, 1), dtype=jnp.float32)
    out_b = apply_noise_offset_pallas(noise_b, offset_b, 0.2)
    out_b = jax.block_until_ready(out_b)
    expected_b = noise_b + 0.2 * offset_b
    assert jnp.allclose(out_b, expected_b, atol=1e-6, rtol=1e-6), "mismatch (small-spatial path)"

    print("KERNEL_OK")
</pallas_src>

<mosaic_0001>
module attributes {stable_mosaic.version = 11 : i64} {
  func.func @_noise_offset_kernel(%arg0: i32, %arg1: i32, %arg2: memref<8x256xf32, #tpu.memory_space<vmem>>, %arg3: memref<8x1xf32, #tpu.memory_space<vmem>>, %arg4: memref<8x256xf32, #tpu.memory_space<vmem>>) attributes {dimension_semantics = [#tpu.dimension_semantics<parallel>, #tpu.dimension_semantics<parallel>], iteration_bounds = array<i64: 1, 1>, scalar_prefetch = 0 : i64, scratch_operands = 0 : i64, tpu.core_type = #tpu.core_type<tc>, window_params = [{transform_indices = @transform_0, window_bounds = array<i64: 8, 256>}, {transform_indices = @transform_1, window_bounds = array<i64: 8, 1>}, {transform_indices = @transform_2, window_bounds = array<i64: 8, 256>}]} {
    %c0 = arith.constant 0 : index
    %c0_0 = arith.constant 0 : index
    %0 = vector.load %arg3[%c0, %c0_0] : memref<8x1xf32, #tpu.memory_space<vmem>>, vector<8x1xf32>
    %cst = arith.constant 1.000000e-01 : f32
    %1 = vector.broadcast %cst : f32 to vector<8x1xf32>
    %2 = arith.mulf %1, %0 : vector<8x1xf32>
    %c0_1 = arith.constant 0 : index
    %c0_2 = arith.constant 0 : index
    %3 = vector.load %arg2[%c0_1, %c0_2] : memref<8x256xf32, #tpu.memory_space<vmem>>, vector<8x256xf32>
    %4 = vector.broadcast %2 : vector<8x1xf32> to vector<8x256xf32>
    %5 = arith.addf %3, %4 : vector<8x256xf32>
    %c0_3 = arith.constant 0 : index
    %c0_4 = arith.constant 0 : index
    %6 = vector.load %arg4[%c0_3, %c0_4] : memref<8x256xf32, #tpu.memory_space<vmem>>, vector<8x256xf32>
    tpu.vector_store %arg4[%c0_3, %c0_4], %5 {strides = array<i32>} : memref<8x256xf32, #tpu.memory_space<vmem>>, vector<8x256xf32>,
    return
  }
  func.func @transform_0(%arg0: i32, %arg1: i32) -> (i32, i32) {
    %c0_i32 = arith.constant 0 : i32
    return %arg0, %arg1 : i32, i32
  }
  func.func @transform_1(%arg0: i32, %arg1: i32) -> (i32, i32) {
    %c0_i32 = arith.constant 0 : i32
    %c0_i32_0 = arith.constant 0 : i32
    return %arg0, %c0_i32 : i32, i32
  }
  func.func @transform_2(%arg0: i32, %arg1: i32) -> (i32, i32) {
    %c0_i32 = arith.constant 0 : i32
    return %arg0, %arg1 : i32, i32
  }
}

</mosaic_0001>

<llo_original>
// kernel: tpu_custom_call.1
$region0: #{tpu_custom_call.1}
  #allocation0 [shape = 'u32[]', space=smem, size = 0x4, offset = 0x4, fixed_abs, tag = 'smem constant byte address 0x4 - core index']
  #allocation1 [shape = 'u32[144,128]{1,0:T(1,128)}', space=vmem, size = 0x12000, scoped, tag = 'internal scratch']
  %s0 = inlined_call_operand.hbm [shape: f32[8,256], index: 0, kind: input, shape index: {}]
  %s1 = inlined_call_operand.vmem [shape: f32[8,1], index: 1, kind: input, shape index: {}]
  %s2 = inlined_call_operand.hbm [shape: f32[8,256], index: 2, kind: output, shape index: {}]
  %s3 = sld [smem:[#allocation0]]
  $region22: #{tpu_custom_call.1} parent=0
    _
  %s5 = ssub.s32 1, %s3
  %s6 = scalar_select 0, %s5, %s3
  $region1: #{tpu_custom_call.1} parent=0
    #allocation2 [shape = 'u8[8192]{0}', space=vmem, size = 0x2000, scoped, tag = 'input window, operand 0, single buffered']
    #allocation3 [shape = 's32[1]{0}', space=sflag, size = 0x4, scoped, tag = 'scoped memory for tpu_custom_call.1']
    #allocation4 [shape = 's32[1]{0}', space=sflag, size = 0x4, scoped, tag = 'scoped memory for tpu_custom_call.1']
    #allocation5 [shape = 'u8[8192]{0}', space=vmem, size = 0x2000, scoped, tag = 'output window, operand 0, single buffered']
    %7 = vsyncpa [#allocation3], 0
    %8 = vsyncpa [#allocation4], 0
    // Predicated region
    $region2: #{tpu_custom_call.1} parent=1 // pred_check
      _
    $region3: #{tpu_custom_call.1} parent=1 // pred_check_branch
      %10 = sbr.rel (0) target = $region5
    $region4: #{tpu_custom_call.1} parent=1 // pred_region
      %s12 = ssub.s32 256, 256
      %13 = vsyncadd [#allocation3], %s12
      %s15 = sshll.u32 [#allocation2], 4
      %s16 = int_to_ptr.vmem [resolvable:$true] %s15
      %18 = dma.hbm_to_vmem [thread:$0]  %s0, 256, %s16, [#allocation3]
    $region5: #{tpu_custom_call.1} parent=1 // pred_fallthru
      _
    // Predicated region
    $region6: #{tpu_custom_call.1} parent=1 // pred_check
      _
    $region7: #{tpu_custom_call.1} parent=1 // pred_check_branch
      %20 = sbr.rel (0) target = $region9
    $region8: #{tpu_custom_call.1} parent=1 // pred_region
      _
    $region9: #{tpu_custom_call.1} parent=1 // pred_fallthru
      _
    // Predicated region
    $region10: #{tpu_custom_call.1} parent=1 // pred_check
      _
    $region11: #{tpu_custom_call.1} parent=1 // pred_check_branch
      %22 = sbr.rel (0) target = $region13
    $region12: #{tpu_custom_call.1} parent=1 // pred_region
      %23 = dma.done [#allocation3], 256
    $region13: #{tpu_custom_call.1} parent=1 // pred_fallthru
      _
    %v24 = vld [vmem:[%s1] sm:$0xff]
    %v25 = vmul.f32 %v24, 0.1
    %v26 = vld [vmem:[#allocation2] sm:$0xff]
    %v27 = vld [vmem:[#allocation2 + $0x8] sm:$0xff]
    %29 = vset.pattern.permute.xlu0 0
    %30 = vperm.xlu0 %29, %v25
    %v31 = vpop.permute.xlu0 %30
    %v33 = vadd.f32 %v26, %v31
    %v34 = vadd.f32 %v27, %v31
    %35 = vst [vmem:[#allocation5] sm:$0xff] %v33
    %36 = vst [vmem:[#allocation5 + $0x8] sm:$0xff] %v34
    // Predicated region
    $region14: #{tpu_custom_call.1} parent=1 // pred_check
      _
    $region15: #{tpu_custom_call.1} parent=1 // pred_check_branch
      %38 = sbr.rel (0) target = $region17
    $region16: #{tpu_custom_call.1} parent=1 // pred_region
      %s40 = ssub.s32 256, 256
      %41 = vsyncadd [#allocation4], %s40
      %s43 = sshll.u32 [#allocation5], 4
      %s44 = int_to_ptr.vmem [resolvable:$true] %s43
      %46 = dma.vmem_to_hbm [thread:$0]  %s44, 256, %s2, [#allocation4]
    $region17: #{tpu_custom_call.1} parent=1 // pred_fallthru
      _
    // Predicated region
    $region18: #{tpu_custom_call.1} parent=1 // pred_check
      _
    $region19: #{tpu_custom_call.1} parent=1 // pred_check_branch
      %48 = sbr.rel (0) target = $region21
    $region20: #{tpu_custom_call.1} parent=1 // pred_region
      %49 = dma.done [#allocation4], 256
    $region21: #{tpu_custom_call.1} parent=1 // pred_fallthru
      _
    %50 = vsyncpa [#allocation3], 1
    %51 = vsyncpa [#allocation4], 1

</llo_original>
